<compile_context>
chip_gen: v6e
topology: v6e:2x2x1
jax: 0.10.0
libtpu: 0.0.40
codegen_flags: <defaults>
</compile_context>

<pallas_src>
import functools

import jax
import jax.numpy as jnp
from jax.experimental import pallas as pl
from jax.experimental.pallas import tpu as pltpu

_LANE = 128
_SUBLANE = 8


def _dice_kernel(p_ref, t_ref, pt_ref, den_ref, *, valid_rows, tm, spc):
    c = pl.program_id(0)  # TensorCore shard ("parallel" axis)
    j = pl.program_id(1)  # streaming step within the shard ("arbitrary")

    @pl.when(j == 0)
    def _():
        pt_ref[...] = jnp.zeros_like(pt_ref)
        den_ref[...] = jnp.zeros_like(den_ref)

    # Cast in-register; HBM traffic stays in the input's native dtype.
    p = p_ref[...].astype(jnp.float32)
    t = t_ref[...].astype(jnp.float32)
    pt = p * t
    den = p * p + t * t  # fused denominator accumulator

    def accum(ref, x):
        # Per-step reduce at vreg granularity only (pure VPU adds); the final
        # cross-sublane/lane reduce is deferred to the tiny JAX epilogue.
        if tm % _SUBLANE == 0:
            ref[...] += jnp.sum(
                x.reshape(tm // _SUBLANE, _SUBLANE, _LANE), axis=0)
        else:
            # Tiny single-block inputs whose row count is not a multiple of 8.
            ref[0:1, :] += jnp.sum(x, axis=0, keepdims=True)

    # Logical (pre-clamp) block index. Blocks whose row range extends past
    # `valid_rows` (the ragged last block and any clamped duplicate blocks
    # from rounding steps up to a multiple of the core count) are masked;
    # all other blocks take the mask-free fast path.
    gidx = c * spc + j
    block_end = (gidx + 1) * tm

    @pl.when(block_end <= valid_rows)
    def _():  # fully valid block: no iota / select cost
        accum(pt_ref, pt)
        accum(den_ref, den)

    @pl.when(block_end > valid_rows)
    def _():  # ragged / duplicate block: select (not multiply) discards garbage
        row = jax.lax.broadcasted_iota(jnp.int32, pt.shape, 0) + gidx * tm
        keep = row < valid_rows
        accum(pt_ref, jnp.where(keep, pt, 0.0))
        accum(den_ref, jnp.where(keep, den, 0.0))


def dice_coefficient(prediction, target, eps=1e-6, tm=4096):
    """Pallas TPU implementation of DiceCoefficient.forward."""
    assert tm % _SUBLANE == 0, "tm must be a multiple of 8 sublanes"
    p = prediction.reshape(-1)
    t = target.reshape(-1)
    n = p.shape[0]

    tail = n % _LANE
    m = n - tail

    tail_pt = jnp.float32(0.0)
    tail_den = jnp.float32(0.0)
    if tail:
        # <128 trailing elements: reduce them with a tiny JAX sum instead of
        # jnp.pad-ing (and re-writing) the whole tensor in HBM.
        p_tail = jax.lax.slice(p, (m,), (n,)).astype(jnp.float32)
        t_tail = jax.lax.slice(t, (m,), (n,)).astype(jnp.float32)
        tail_pt = jnp.sum(p_tail * t_tail)
        tail_den = jnp.sum(p_tail * p_tail) + jnp.sum(t_tail * t_tail)
        # TODO(synk): this aligned-prefix slice can still materialize a copy in
        # XLA; a fully zero-copy ragged path would need a manual 1-D DMA kernel.
        p = jax.lax.slice(p, (0,), (m,))
        t = jax.lax.slice(t, (0,), (m,))

    if m == 0:  # everything lived in the (tiny) tail
        denominator = jnp.maximum(tail_den, eps)
        return 2.0 * tail_pt / denominator

    rows = m // _LANE
    p = p.reshape(rows, _LANE)  # free, lane-dense view
    t = t.reshape(rows, _LANE)

    # One block covering the whole array for small inputs (avoids processing
    # mostly-masked tiles); otherwise tm-row tiles. Steps are split across a
    # leading "parallel" axis so v7x's two TensorCores each stream half the
    # rows; on v5e/v6e (1 TC) that axis is just an outer loop.
    tm_eff = rows if rows <= tm else tm
    steps = -(-rows // tm_eff)
    n_cores = 2 if steps >= 2 else 1
    spc = -(-steps // n_cores)  # steps per core (rounded up; duplicates masked)

    kernel = functools.partial(
        _dice_kernel, valid_rows=rows, tm=tm_eff, spc=spc)

    cost = pl.CostEstimate(
        flops=6 * m,
        transcendentals=0,
        bytes_accessed=int(p.size * p.dtype.itemsize
                           + t.size * t.dtype.itemsize
                           + 2 * n_cores * _SUBLANE * _LANE * 4),
    )

    in_map = lambda c, j: (jnp.minimum(c * spc + j, steps - 1), 0)
    out_map = lambda c, j: (c, 0)

    pt_part, den_part = pl.pallas_call(
        kernel,
        out_shape=(
            jax.ShapeDtypeStruct((n_cores * _SUBLANE, _LANE), jnp.float32),
            jax.ShapeDtypeStruct((n_cores * _SUBLANE, _LANE), jnp.float32),
        ),
        grid_spec=pltpu.PrefetchScalarGridSpec(
            num_scalar_prefetch=0,
            grid=(n_cores, spc),
            in_specs=[
                pl.BlockSpec((tm_eff, _LANE), in_map),
                pl.BlockSpec((tm_eff, _LANE), in_map),
            ],
            out_specs=[
                pl.BlockSpec((_SUBLANE, _LANE), out_map),
                pl.BlockSpec((_SUBLANE, _LANE), out_map),
            ],
        ),
        compiler_params=pltpu.CompilerParams(
            dimension_semantics=("parallel", "arbitrary"),
            # Headroom over v5e's 16 MiB default scoped limit so tm can be
            # swept up to ~8192 rows; still well under v7x's 64 MiB physical.
            vmem_limit_bytes=32 * 1024 * 1024,
        ),
        cost_estimate=cost,
    )(p, t)

    intersection = jnp.sum(pt_part) + tail_pt
    # jnp.maximum == torch .clamp(min=eps) for this always-nonnegative sum.
    denominator = jnp.maximum(jnp.sum(den_part) + tail_den, eps)
    return 2.0 * intersection / denominator


def _reference(prediction, target, eps=1e-6):
    pf = prediction.astype(jnp.float32)
    tf = target.astype(jnp.float32)
    inter = jnp.sum(pf * tf)
    denom = jnp.sum(pf * pf) + jnp.sum(tf * tf)
    return 2.0 * inter / jnp.maximum(denom, eps)


if __name__ == "__main__":
    key = jax.random.PRNGKey(0)
    k1, k2, k3, k4, k5, k6 = jax.random.split(key, 6)

    # Primary test: NCHW segmentation-style input (2, 4, 16, 16).
    prediction = jax.random.uniform(k1, (2, 4, 16, 16), dtype=jnp.float32)
    target = (jax.random.uniform(k2, (2, 4, 16, 16)) > 0.5).astype(jnp.float32)
    dice = jax.block_until_ready(dice_coefficient(prediction, target))
    ref = _reference(prediction, target)
    assert jnp.allclose(dice, ref, rtol=1e-5, atol=1e-6), (dice, ref)

    # Multi-step / two-shard path (tiny tm override): ragged last block and
    # clamped duplicate block are exercised.
    p_b = jax.random.uniform(k3, (2, 4, 16, 18), dtype=jnp.float32)
    t_b = (jax.random.uniform(k4, (2, 4, 16, 18)) > 0.5).astype(jnp.float32)
    dice_b = jax.block_until_ready(dice_coefficient(p_b, t_b, tm=8))
    ref_b = _reference(p_b, t_b)
    assert jnp.allclose(dice_b, ref_b, rtol=1e-5, atol=1e-6), (dice_b, ref_b)

    # Lane-tail path (numel % 128 != 0) with a non-multiple-of-8 row count.
    p_c = jax.random.uniform(k5, (3, 5, 7, 11), dtype=jnp.float32)
    t_c = (jax.random.uniform(k6, (3, 5, 7, 11)) > 0.5).astype(jnp.float32)
    dice_c = jax.block_until_ready(dice_coefficient(p_c, t_c))
    ref_c = _reference(p_c, t_c)
    assert jnp.allclose(dice_c, ref_c, rtol=1e-5, atol=1e-6), (dice_c, ref_c)

    print("KERNEL_OK")
</pallas_src>

<mosaic_0001>
module attributes {stable_mosaic.version = 11 : i64} {
  func.func @_dice_kernel(%arg0: i32, %arg1: i32, %arg2: memref<16x128xf32, #tpu.memory_space<vmem>>, %arg3: memref<16x128xf32, #tpu.memory_space<vmem>>, %arg4: memref<8x128xf32, #tpu.memory_space<vmem>>, %arg5: memref<8x128xf32, #tpu.memory_space<vmem>>) attributes {dimension_semantics = [#tpu.dimension_semantics<parallel>, #tpu.dimension_semantics<arbitrary>], iteration_bounds = array<i64: 1, 1>, scalar_prefetch = 0 : i64, scratch_operands = 0 : i64, tpu.core_type = #tpu.core_type<tc>, window_params = [{transform_indices = @transform_0, window_bounds = array<i64: 16, 128>}, {transform_indices = @transform_1, window_bounds = array<i64: 16, 128>}, {transform_indices = @transform_2, window_bounds = array<i64: 8, 128>}, {transform_indices = @transform_3, window_bounds = array<i64: 8, 128>}]} {
    %c0_i32 = arith.constant 0 : i32
    %0 = arith.cmpi eq, %arg1, %c0_i32 : i32
    %1 = arith.extui %0 : i1 to i32
    %c0_i32_0 = arith.constant 0 : i32
    %2 = arith.cmpi ne, %1, %c0_i32_0 : i32
    scf.if %2 {
      %cst = arith.constant 0.000000e+00 : f32
      %19 = vector.broadcast %cst : f32 to vector<8x128xf32>
      %c0_9 = arith.constant 0 : index
      %c0_10 = arith.constant 0 : index
      %20 = vector.load %arg4[%c0_9, %c0_10] : memref<8x128xf32, #tpu.memory_space<vmem>>, vector<8x128xf32>
      tpu.vector_store %arg4[%c0_9, %c0_10], %19 {strides = array<i32>} : memref<8x128xf32, #tpu.memory_space<vmem>>, vector<8x128xf32>,
      %cst_11 = arith.constant 0.000000e+00 : f32
      %21 = vector.broadcast %cst_11 : f32 to vector<8x128xf32>
      %c0_12 = arith.constant 0 : index
      %c0_13 = arith.constant 0 : index
      %22 = vector.load %arg5[%c0_12, %c0_13] : memref<8x128xf32, #tpu.memory_space<vmem>>, vector<8x128xf32>
      tpu.vector_store %arg5[%c0_12, %c0_13], %21 {strides = array<i32>} : memref<8x128xf32, #tpu.memory_space<vmem>>, vector<8x128xf32>,
    } else {
    }
    %c0 = arith.constant 0 : index
    %c0_1 = arith.constant 0 : index
    %3 = vector.load %arg2[%c0, %c0_1] : memref<16x128xf32, #tpu.memory_space<vmem>>, vector<16x128xf32>
    %c0_2 = arith.constant 0 : index
    %c0_3 = arith.constant 0 : index
    %4 = vector.load %arg3[%c0_2, %c0_3] : memref<16x128xf32, #tpu.memory_space<vmem>>, vector<16x128xf32>
    %5 = arith.mulf %3, %4 : vector<16x128xf32>
    %6 = arith.mulf %3, %3 : vector<16x128xf32>
    %7 = arith.mulf %4, %4 : vector<16x128xf32>
    %8 = arith.addf %6, %7 : vector<16x128xf32>
    %c1_i32 = arith.constant 1 : i32
    %9 = arith.muli %arg0, %c1_i32 : i32
    %10 = arith.addi %9, %arg1 : i32
    %c1_i32_4 = arith.constant 1 : i32
    %11 = arith.addi %10, %c1_i32_4 : i32
    %c16_i32 = arith.constant 16 : i32
    %12 = arith.muli %11, %c16_i32 : i32
    %c16_i32_5 = arith.constant 16 : i32
    %13 = arith.cmpi sle, %12, %c16_i32_5 : i32
    %14 = arith.extui %13 : i1 to i32
    %c0_i32_6 = arith.constant 0 : i32
    %15 = arith.cmpi ne, %14, %c0_i32_6 : i32
    scf.if %15 {
      %c0_9 = arith.constant 0 : index
      %c0_10 = arith.constant 0 : index
      %19 = vector.load %arg4[%c0_9, %c0_10] : memref<8x128xf32, #tpu.memory_space<vmem>>, vector<8x128xf32>
      %20 = vector.shape_cast %5 : vector<16x128xf32> to vector<2x8x128xf32>
      %cst = arith.constant dense<0.000000e+00> : vector<8x128xf32>
      %21 = vector.multi_reduction <add>, %20, %cst [0] : vector<2x8x128xf32> to vector<8x128xf32>
      %22 = arith.addf %19, %21 : vector<8x128xf32>
      %c0_11 = arith.constant 0 : index
      %c0_12 = arith.constant 0 : index
      %23 = vector.load %arg4[%c0_11, %c0_12] : memref<8x128xf32, #tpu.memory_space<vmem>>, vector<8x128xf32>
      tpu.vector_store %arg4[%c0_11, %c0_12], %22 {strides = array<i32>} : memref<8x128xf32, #tpu.memory_space<vmem>>, vector<8x128xf32>,
      %c0_13 = arith.constant 0 : index
      %c0_14 = arith.constant 0 : index
      %24 = vector.load %arg5[%c0_13, %c0_14] : memref<8x128xf32, #tpu.memory_space<vmem>>, vector<8x128xf32>
      %25 = vector.shape_cast %8 : vector<16x128xf32> to vector<2x8x128xf32>
      %cst_15 = arith.constant dense<0.000000e+00> : vector<8x128xf32>
      %26 = vector.multi_reduction <add>, %25, %cst_15 [0] : vector<2x8x128xf32> to vector<8x128xf32>
      %27 = arith.addf %24, %26 : vector<8x128xf32>
      %c0_16 = arith.constant 0 : index
      %c0_17 = arith.constant 0 : index
      %28 = vector.load %arg5[%c0_16, %c0_17] : memref<8x128xf32, #tpu.memory_space<vmem>>, vector<8x128xf32>
      tpu.vector_store %arg5[%c0_16, %c0_17], %27 {strides = array<i32>} : memref<8x128xf32, #tpu.memory_space<vmem>>, vector<8x128xf32>,
    } else {
    }
    %c16_i32_7 = arith.constant 16 : i32
    %16 = arith.cmpi sgt, %12, %c16_i32_7 : i32
    %17 = arith.extui %16 : i1 to i32
    %c0_i32_8 = arith.constant 0 : i32
    %18 = arith.cmpi ne, %17, %c0_i32_8 : i32
    scf.if %18 {
      %19 = tpu.iota {dimensions = array<i32: 0>} : vector<16x128xi32>
      %c16_i32_9 = arith.constant 16 : i32
      %20 = arith.muli %10, %c16_i32_9 : i32
      %21 = vector.broadcast %20 : i32 to vector<16x128xi32>
      %22 = arith.addi %19, %21 : vector<16x128xi32>
      %c16_i32_10 = arith.constant 16 : i32
      %23 = vector.broadcast %c16_i32_10 : i32 to vector<16x128xi32>
      %24 = arith.cmpi slt, %22, %23 : vector<16x128xi32>
      %cst = arith.constant 0.000000e+00 : f32
      %25 = vector.broadcast %cst : f32 to vector<16x128xf32>
      %26 = arith.select %24, %5, %25 : vector<16x128xi1>, vector<16x128xf32>
      %c0_11 = arith.constant 0 : index
      %c0_12 = arith.constant 0 : index
      %27 = vector.load %arg4[%c0_11, %c0_12] : memref<8x128xf32, #tpu.memory_space<vmem>>, vector<8x128xf32>
      %28 = vector.shape_cast %26 : vector<16x128xf32> to vector<2x8x128xf32>
      %cst_13 = arith.constant dense<0.000000e+00> : vector<8x128xf32>
      %29 = vector.multi_reduction <add>, %28, %cst_13 [0] : vector<2x8x128xf32> to vector<8x128xf32>
      %30 = arith.addf %27, %29 : vector<8x128xf32>
      %c0_14 = arith.constant 0 : index
      %c0_15 = arith.constant 0 : index
      %31 = vector.load %arg4[%c0_14, %c0_15] : memref<8x128xf32, #tpu.memory_space<vmem>>, vector<8x128xf32>
      tpu.vector_store %arg4[%c0_14, %c0_15], %30 {strides = array<i32>} : memref<8x128xf32, #tpu.memory_space<vmem>>, vector<8x128xf32>,
      %cst_16 = arith.constant 0.000000e+00 : f32
      %32 = vector.broadcast %cst_16 : f32 to vector<16x128xf32>
      %33 = arith.select %24, %8, %32 : vector<16x128xi1>, vector<16x128xf32>
      %c0_17 = arith.constant 0 : index
      %c0_18 = arith.constant 0 : index
      %34 = vector.load %arg5[%c0_17, %c0_18] : memref<8x128xf32, #tpu.memory_space<vmem>>, vector<8x128xf32>
      %35 = vector.shape_cast %33 : vector<16x128xf32> to vector<2x8x128xf32>
      %cst_19 = arith.constant dense<0.000000e+00> : vector<8x128xf32>
      %36 = vector.multi_reduction <add>, %35, %cst_19 [0] : vector<2x8x128xf32> to vector<8x128xf32>
      %37 = arith.addf %34, %36 : vector<8x128xf32>
      %c0_20 = arith.constant 0 : index
      %c0_21 = arith.constant 0 : index
      %38 = vector.load %arg5[%c0_20, %c0_21] : memref<8x128xf32, #tpu.memory_space<vmem>>, vector<8x128xf32>
      tpu.vector_store %arg5[%c0_20, %c0_21], %37 {strides = array<i32>} : memref<8x128xf32, #tpu.memory_space<vmem>>, vector<8x128xf32>,
    } else {
    }
    return
  }
  func.func @transform_0(%arg0: i32, %arg1: i32) -> (i32, i32) {
    %c1_i32 = arith.constant 1 : i32
    %0 = arith.muli %arg0, %c1_i32 : i32
    %1 = arith.addi %0, %arg1 : i32
    %c0_i32 = arith.constant 0 : i32
    %2 = arith.minsi %1, %c0_i32 : i32
    %c0_i32_0 = arith.constant 0 : i32
    %c0_i32_1 = arith.constant 0 : i32
    return %2, %c0_i32_0 : i32, i32
  }
  func.func @transform_1(%arg0: i32, %arg1: i32) -> (i32, i32) {
    %c1_i32 = arith.constant 1 : i32
    %0 = arith.muli %arg0, %c1_i32 : i32
    %1 = arith.addi %0, %arg1 : i32
    %c0_i32 = arith.constant 0 : i32
    %2 = arith.minsi %1, %c0_i32 : i32
    %c0_i32_0 = arith.constant 0 : i32
    %c0_i32_1 = arith.constant 0 : i32
    return %2, %c0_i32_0 : i32, i32
  }
  func.func @transform_2(%arg0: i32, %arg1: i32) -> (i32, i32) {
    %c0_i32 = arith.constant 0 : i32
    %c0_i32_0 = arith.constant 0 : i32
    return %arg0, %c0_i32 : i32, i32
  }
  func.func @transform_3(%arg0: i32, %arg1: i32) -> (i32, i32) {
    %c0_i32 = arith.constant 0 : i32
    %c0_i32_0 = arith.constant 0 : i32
    return %arg0, %c0_i32 : i32, i32
  }
}

</mosaic_0001>

<llo_original>
// kernel: tpu_custom_call.1
$region0: #{tpu_custom_call.1}
  #allocation0 [shape = 'u32[]', space=smem, size = 0x4, offset = 0x4, fixed_abs, tag = 'smem constant byte address 0x4 - core index']
  #allocation1 [shape = 'u32[144,128]{1,0:T(1,128)}', space=vmem, size = 0x12000, scoped, tag = 'internal scratch']
  %s0 = inlined_call_operand.hbm [shape: f32[16,128], index: 0, kind: input, shape index: {}]
  %s1 = inlined_call_operand.hbm [shape: f32[16,128], index: 1, kind: input, shape index: {}]
  %s2 = inlined_call_operand.hbm [shape: f32[8,128], index: 2, kind: output, shape index: {0}]
  %s3 = inlined_call_operand.hbm [shape: f32[8,128], index: 3, kind: output, shape index: {1}]
  %4 = xla_tuple %s2, %s3
  %s5 = sld [smem:[#allocation0]]
  $region46: #{tpu_custom_call.1} parent=0
    _
  %s7 = ssub.s32 1, %s5
  %s8 = scalar_select 0, %s7, %s5
  $region1: #{tpu_custom_call.1} parent=0
    #allocation2 [shape = 'u8[8192]{0}', space=vmem, size = 0x2000, scoped, tag = 'input window, operand 0, single buffered']
    #allocation3 [shape = 's32[1]{0}', space=sflag, size = 0x4, scoped, tag = 'scoped memory for tpu_custom_call.1']
    #allocation4 [shape = 's32[1]{0}', space=sflag, size = 0x4, scoped, tag = 'scoped memory for tpu_custom_call.1']
    #allocation5 [shape = 'u8[8192]{0}', space=vmem, size = 0x2000, scoped, tag = 'input window, operand 1, single buffered']
    #allocation6 [shape = 's32[1]{0}', space=sflag, size = 0x4, scoped, tag = 'scoped memory for tpu_custom_call.1']
    #allocation7 [shape = 'u8[4096]{0}', space=vmem, size = 0x1000, scoped, tag = 'output window, operand 0, single buffered']
    #allocation8 [shape = 'u8[4096]{0}', space=vmem, size = 0x1000, scoped, tag = 'output window, operand 1, single buffered']
    #allocation9 [shape = 's32[1]{0}', space=sflag, size = 0x4, scoped, tag = 'scoped memory for tpu_custom_call.1']
    %9 = vsyncpa [#allocation3], 0
    %10 = vsyncpa [#allocation6], 0
    %11 = vsyncpa [#allocation4], 0
    %12 = vsyncpa [#allocation9], 0
    // Predicated region
    $region2: #{tpu_custom_call.1} parent=1 // pred_check
      _
    $region3: #{tpu_custom_call.1} parent=1 // pred_check_branch
      %14 = sbr.rel (0) target = $region5
    $region4: #{tpu_custom_call.1} parent=1 // pred_region
      %s15 = sadd.s32 0, 0
      %p16 = scmp.lt.s32.totalorder %s15, 0
      %s17 = scalar_select %p16, %s15, 0
      %s18 = smul.u32 2, %s17
      %s20 = ssub.s32 256, 256
      %21 = vsyncadd [#allocation3], %s20
      %s22 = smul.addr %s18, 128
      %s23 = scalar_lea.hbm %s0, %s22
      %s24 = sshll.u32 [#allocation2], 4
      %s25 = int_to_ptr.vmem [resolvable:$true] %s24
      %30 = dma.hbm_to_vmem [thread:$0]  %s23, 256, %s25, [#allocation3], 128, 128, 8
    $region5: #{tpu_custom_call.1} parent=1 // pred_fallthru
      _
    // Predicated region
    $region6: #{tpu_custom_call.1} parent=1 // pred_check
      _
    $region7: #{tpu_custom_call.1} parent=1 // pred_check_branch
      %32 = sbr.rel (0) target = $region9
    $region8: #{tpu_custom_call.1} parent=1 // pred_region
      %s33 = sadd.s32 0, 0
      %p34 = scmp.lt.s32.totalorder %s33, 0
      %s35 = scalar_select %p34, %s33, 0
      %s36 = smul.u32 2, %s35
      %s38 = ssub.s32 256, 256
      %39 = vsyncadd [#allocation6], %s38
      %s40 = smul.addr %s36, 128
      %s41 = scalar_lea.hbm %s1, %s40
      %s42 = sshll.u32 [#allocation5], 4
      %s43 = int_to_ptr.vmem [resolvable:$true] %s42
      %48 = dma.hbm_to_vmem [thread:$0]  %s41, 256, %s43, [#allocation6], 128, 128, 8
    $region9: #{tpu_custom_call.1} parent=1 // pred_fallthru
      _
    // Predicated region
    $region10: #{tpu_custom_call.1} parent=1 // pred_check
      _
    $region11: #{tpu_custom_call.1} parent=1 // pred_check_branch
      %50 = sbr.rel (0) target = $region13
    $region12: #{tpu_custom_call.1} parent=1 // pred_region
      %51 = dma.done [#allocation3], 256
    $region13: #{tpu_custom_call.1} parent=1 // pred_fallthru
      _
    // Predicated region
    $region14: #{tpu_custom_call.1} parent=1 // pred_check
      _
    $region15: #{tpu_custom_call.1} parent=1 // pred_check_branch
      %53 = sbr.rel (0) target = $region17
    $region16: #{tpu_custom_call.1} parent=1 // pred_region
      %54 = dma.done [#allocation6], 256
    $region17: #{tpu_custom_call.1} parent=1 // pred_fallthru
      _
    %s55 = sadd.s32 0, 0
    %p56 = scmp.lt.s32.totalorder %s55, 0
    %s57 = scalar_select %p56, %s55, 0
    %s58 = smul.u32 2, %s57
    %s59 = sadd.s32 0, 0
    %p60 = scmp.lt.s32.totalorder %s59, 0
    %s61 = scalar_select %p60, %s59, 0
    %s62 = smul.u32 2, %s61
    %p63 = scmp.eq.s32.totalorder 0, 0
    // Predicated region
    $region18: #{tpu_custom_call.1} parent=1 // pred_check
      %p64 = pneg %p63
    $region19: #{tpu_custom_call.1} parent=1 // pred_check_branch
      %66 = sbr.rel (%p64) target = $region21
    $region20: #{tpu_custom_call.1} parent=1 // pred_region
      %67 = vst [vmem:[#allocation7] sm:$0xff] 0.0
      %68 = vst [vmem:[#allocation8] sm:$0xff] 0.0
    $region21: #{tpu_custom_call.1} parent=1 // pred_fallthru
      _
    %v69 = vld [vmem:[#allocation2] sm:$0xff]
    %v70 = vld [vmem:[#allocation2 + $0x8] sm:$0xff]
    %v71 = vld [vmem:[#allocation5] sm:$0xff]
    %v72 = vld [vmem:[#allocation5 + $0x8] sm:$0xff]
    %v73 = vmul.f32 %v69, %v71
    %v74 = vmul.f32 %v70, %v72
    %v75 = vmul.f32 %v69, %v69
    %v76 = vmul.f32 %v70, %v70
    %v77 = vmul.f32 %v71, %v71
    %v78 = vmul.f32 %v72, %v72
    %v79 = vadd.f32 %v75, %v77
    %v80 = vadd.f32 %v76, %v78
    %s81 = sadd.s32 0, 0
    %s82 = sadd.s32 %s81, 1
    %s83 = smul.u32 %s82, 16
    %p84 = scmp.le.s32.totalorder %s83, 16
    // Predicated region
    $region22: #{tpu_custom_call.1} parent=1 // pred_check
      %p85 = pneg %p84
    $region23: #{tpu_custom_call.1} parent=1 // pred_check_branch
      %87 = sbr.rel (%p85) target = $region25
    $region24: #{tpu_custom_call.1} parent=1 // pred_region
      %v88 = vld [vmem:[#allocation7] sm:$0xff]
      %v89 = vadd.f32 %v73, %v74
      %v90 = vadd.f32 %v88, %v89
      %91 = vst [vmem:[#allocation7] sm:$0xff] %v90
      %v92 = vld [vmem:[#allocation8] sm:$0xff]
      %v93 = vadd.f32 %v79, %v80
      %v94 = vadd.f32 %v92, %v93
      %95 = vst [vmem:[#allocation8] sm:$0xff] %v94
    $region25: #{tpu_custom_call.1} parent=1 // pred_fallthru
      _
    %p96 = scmp.gt.s32.totalorder %s83, 16
    // Predicated region
    $region26: #{tpu_custom_call.1} parent=1 // pred_check
      %p97 = pneg %p96
    $region27: #{tpu_custom_call.1} parent=1 // pred_check_branch
      %99 = sbr.rel (%p97) target = $region29
    $region28: #{tpu_custom_call.1} parent=1 // pred_region
      %v100 = vlaneseq
      %v101 = vshrl.u32 %v100, 7
      %v102 = vadd.s32 %v101, 8
      %s103 = smul.u32 %s81, 16
      %v104 = vstv %s103
      %v105 = vadd.s32 %v101, %v104
      %v106 = vadd.s32 %v102, %v104
      %vm107 = vcmp.lt.s32.totalorder %v105, 16
      %vm108 = vcmp.lt.s32.totalorder %v106, 16
      %v109 = vsel %vm107, %v73, 0.0
      %v110 = vsel %vm108, %v74, 0.0
      %v111 = vld [vmem:[#allocation7] sm:$0xff]
      %v112 = vadd.f32 %v109, %v110
      %v113 = vadd.f32 %v111, %v112
      %114 = vst [vmem:[#allocation7] sm:$0xff] %v113
      %v115 = vsel %vm107, %v79, 0.0
      %v116 = vsel %vm108, %v80, 0.0
      %v117 = vld [vmem:[#allocation8] sm:$0xff]
      %v118 = vadd.f32 %v115, %v116
      %v119 = vadd.f32 %v117, %v118
      %120 = vst [vmem:[#allocation8] sm:$0xff] %v119
    $region29: #{tpu_custom_call.1} parent=1 // pred_fallthru
      _
    // Predicated region
    $region30: #{tpu_custom_call.1} parent=1 // pred_check
      _
    $region31: #{tpu_custom_call.1} parent=1 // pred_check_branch
      %122 = sbr.rel (0) target = $region33
    $region32: #{tpu_custom_call.1} parent=1 // pred_region
      %s124 = ssub.s32 128, 128
      %125 = vsyncadd [#allocation4], %s124
      %s127 = sshll.u32 [#allocation7], 4
      %s128 = int_to_ptr.vmem [resolvable:$true] %s127
      %130 = dma.vmem_to_hbm [thread:$0]  %s128, 128, %s2, [#allocation4]
    $region33: #{tpu_custom_call.1} parent=1 // pred_fallthru
      _
    // Predicated region
    $region34: #{tpu_custom_call.1} parent=1 // pred_check
      _
    $region35: #{tpu_custom_call.1} parent=1 // pred_check_branch
      %132 = sbr.rel (0) target = $region37
    $region36: #{tpu_custom_call.1} parent=1 // pred_region
      %s134 = ssub.s32 128, 128
      %135 = vsyncadd [#allocation9], %s134
      %s137 = sshll.u32 [#allocation8], 4
      %s138 = int_to_ptr.vmem [resolvable:$true] %s137
      %140 = dma.vmem_to_hbm [thread:$0]  %s138, 128, %s3, [#allocation9]
    $region37: #{tpu_custom_call.1} parent=1 // pred_fallthru
      _
    // Predicated region
    $region38: #{tpu_custom_call.1} parent=1 // pred_check
      _
    $region39: #{tpu_custom_call.1} parent=1 // pred_check_branch
      %142 = sbr.rel (0) target = $region41
    $region40: #{tpu_custom_call.1} parent=1 // pred_region
      %143 = dma.done [#allocation4], 128
    $region41: #{tpu_custom_call.1} parent=1 // pred_fallthru
      _
    // Predicated region
    $region42: #{tpu_custom_call.1} parent=1 // pred_check
      _
    $region43: #{tpu_custom_call.1} parent=1 // pred_check_branch
      %145 = sbr.rel (0) target = $region45
    $region44: #{tpu_custom_call.1} parent=1 // pred_region
      %146 = dma.done [#allocation9], 128
    $region45: #{tpu_custom_call.1} parent=1 // pred_fallthru
      _
    %147 = vsyncpa [#allocation3], 1
    %148 = vsyncpa [#allocation6], 1
    %149 = vsyncpa [#allocation4], 1
    %150 = vsyncpa [#allocation9], 1

</llo_original>
